<compile_context>
chip_gen: v5e
topology: v5e:2x2
jax: 0.10.0
libtpu: 0.0.40
codegen_flags: <defaults>
</compile_context>

<pallas_src>
import jax
import jax.numpy as jnp
from jax.experimental import pallas as pl
from jax.experimental.pallas import tpu as pltpu


def _round_up(x, m):
    return (x + m - 1) // m * m


# ---------------------------------------------------------------------------
# One-time (import-time) probe: can this JAX single-buffer a constant block?
# ---------------------------------------------------------------------------
def _probe_single_buffering():
    try:
        def _copy(x_ref, o_ref):
            o_ref[...] = x_ref[...] * 1.0

        fn = pl.pallas_call(
            _copy,
            out_shape=jax.ShapeDtypeStruct((16, 128), jnp.float32),
            grid=(2,),
            in_specs=[pl.BlockSpec((8, 128), lambda i: (0, 0),
                                   pipeline_mode=pl.Buffered(1))],
            out_specs=pl.BlockSpec((8, 128), lambda i: (i, 0)),
        )
        jax.block_until_ready(fn(jnp.ones((8, 128), jnp.float32)))
        return True
    except Exception:
        return False


_SINGLE_BUFFER_WEIGHTS = _probe_single_buffering()


def _const_spec(shape):
    """BlockSpec for a grid-invariant (weight/bias) operand: constant index map,
    single-buffered when pipeline_mode=pl.Buffered(1) is supported."""
    index_map = lambda g: (0,) * len(shape)
    if _SINGLE_BUFFER_WEIGHTS:
        return pl.BlockSpec(shape, index_map, pipeline_mode=pl.Buffered(1))
    return pl.BlockSpec(shape, index_map)


# ---------------------------------------------------------------------------
# Kernel 1: imgbev_embed = 1x1 conv (no bias) + BatchNorm, folded into an affine.
# ---------------------------------------------------------------------------
def _embed_kernel(x_ref, w_ref, b_ref, o_ref):
    _, H, W, Csp = x_ref.shape
    Ctp = o_ref.shape[3]
    x = x_ref[...].reshape(H * W, Csp)
    y = jnp.dot(x, w_ref[...], preferred_element_type=jnp.float32) + b_ref[...]
    o_ref[...] = y.reshape(1, H, W, Ctp)


def prepare_embed_params(w, gamma, beta, mean, var, eps=1e-5):
    """Fold BN (eval mode, running stats) into the 1x1 conv and pad channels to
    lane-dense multiples of 128 (padded rows/cols and bias entries stay zero)."""
    Cs, Ct = w.shape
    Csp, Ctp = _round_up(Cs, 128), _round_up(Ct, 128)
    scale = gamma / jnp.sqrt(var + eps)
    w_eff = w * scale[None, :]
    b_eff = beta - mean * scale
    w_p = jnp.pad(w_eff, ((0, Csp - Cs), (0, Ctp - Ct))).astype(jnp.float32)
    b_p = jnp.pad(b_eff[None, :], ((0, 0), (0, Ctp - Ct))).astype(jnp.float32)
    return w_p, b_p


def imgbev_embed_pallas(x_nchw, w_p, b_p, out_channels):
    """x_nchw: (N, Cs, H, W) -> (N, out_channels, H, W)."""
    N, Cs, H, W = x_nchw.shape
    Csp, Ctp = w_p.shape
    x = jnp.transpose(x_nchw, (0, 2, 3, 1)).astype(jnp.float32)
    x = jnp.pad(x, ((0, 0), (0, 0), (0, 0), (0, Csp - Cs)))
    out = pl.pallas_call(
        _embed_kernel,
        out_shape=jax.ShapeDtypeStruct((N, H, W, Ctp), jnp.float32),
        grid=(N,),
        in_specs=[pl.BlockSpec((1, H, W, Csp), lambda n: (n, 0, 0, 0)),
                  _const_spec((Csp, Ctp)),
                  _const_spec((1, Ctp))],
        out_specs=pl.BlockSpec((1, H, W, Ctp), lambda n: (n, 0, 0, 0)),
        compiler_params=pltpu.CompilerParams(dimension_semantics=("parallel",)),
    )(x, w_p, b_p)
    return jnp.transpose(out[..., :out_channels], (0, 3, 1, 2))


# ---------------------------------------------------------------------------
# get_gt_sample_grid / get_inner_feat (data-dependent sampling, plain JAX).
# ---------------------------------------------------------------------------
def _get_gt_sample_grid(corner_points2d, x_sample_num, y_sample_num, bx, dx, nx):
    """JAX port of FeatureLoss_InnerClip.get_gt_sample_grid for one box.
    corner_points2d: (4, 2) BEV corners (the torch corners[[0, 2, 4, 6], :-1])."""
    p0, p1, p2 = corner_points2d[0], corner_points2d[1], corner_points2d[2]
    dH_y = p0[1] - p1[1]     # (dH_x, dW_y are computed but unused in the torch code)
    dW_x = p0[0] - p2[0]
    raw_grid_x = jnp.tile(jnp.linspace(p0[0], p1[0], x_sample_num)[None, :],
                          (y_sample_num, 1))
    raw_grid_y = jnp.tile(jnp.linspace(p0[1], p2[1], y_sample_num)[:, None],
                          (1, x_sample_num))
    raw_grid = jnp.stack([raw_grid_x, raw_grid_y], axis=-1)
    off_x = jnp.tile(jnp.linspace(0.0, -dW_x, x_sample_num)[:, None], (1, y_sample_num))
    off_y = jnp.tile(jnp.linspace(0.0, -dH_y, y_sample_num)[None, :], (x_sample_num, 1))
    raw_grid_offset = jnp.stack([off_x, off_y], axis=-1)
    grid = raw_grid + raw_grid_offset          # requires x_sample_num == y_sample_num
    gx = (grid[..., 0] - (bx[0] - dx[0] / 2.0)) / dx[0] / (nx[0] - 1.0) * 2.0 - 1.0
    gy = (grid[..., 1] - (bx[1] - dx[1] / 2.0)) / dx[1] / (nx[1] - 1.0) * 2.0 - 1.0
    return jnp.stack([jnp.clip(gx, -1.0, 1.0), jnp.clip(gy, -1.0, 1.0)], axis=-1)


def _grid_sample_bilinear(feat, grid):
    """F.grid_sample(..., mode='bilinear', align_corners=False, padding_mode='zeros')
    for a single (C, H, W) feature map and an (S, S, 2) normalized grid."""
    C, H, W = feat.shape
    gx = (grid[..., 0] + 1.0) * (W / 2.0) - 0.5
    gy = (grid[..., 1] + 1.0) * (H / 2.0) - 0.5
    x0 = jnp.floor(gx)
    y0 = jnp.floor(gy)

    def tap(yy, xx, wgt):
        valid = (xx >= 0) & (xx <= W - 1) & (yy >= 0) & (yy <= H - 1)
        xi = jnp.clip(xx, 0, W - 1).astype(jnp.int32)
        yi = jnp.clip(yy, 0, H - 1).astype(jnp.int32)
        return feat[:, yi, xi] * (wgt * valid)[None, :, :]

    wx1 = gx - x0
    wy1 = gy - y0
    return (tap(y0, x0, (1.0 - wy1) * (1.0 - wx1))
            + tap(y0, x0 + 1.0, (1.0 - wy1) * wx1)
            + tap(y0 + 1.0, x0, wy1 * (1.0 - wx1))
            + tap(y0 + 1.0, x0 + 1.0, wy1 * wx1))


def get_inner_feat(corners2d, img_feats, pts_feats, *, x_sample_num, y_sample_num,
                   bx, dx, nx):
    """Per-gt-bbox key-point sampling of student (img) and teacher (pts) BEV maps.
    corners2d: (N, num_boxes, 4, 2); img/pts_feats: (N, C, H, W);
    returns (N*num_boxes, C, y_sample_num, x_sample_num) each.
    TODO(synk): ragged per-sample box counts, mmdet3d corner extraction and
    enlarged_box() are host-side preprocessing; here every sample carries a fixed number
    of synthetic 2D corner sets and the gather-heavy bilinear sampling stays in JAX/XLA
    rather than a Pallas kernel."""
    def one_box(feat, corners):
        grid = _get_gt_sample_grid(corners, x_sample_num, y_sample_num, bx, dx, nx)
        return _grid_sample_bilinear(feat, grid)

    def one_sample(img_f, pts_f, corners):
        img_s = jax.vmap(lambda c: one_box(img_f, c))(corners)
        pts_s = jax.vmap(lambda c: one_box(pts_f, c))(corners)
        return img_s, pts_s

    img_kd, pts_kd = jax.vmap(one_sample)(img_feats, pts_feats, corners2d)
    img_kd = img_kd.reshape((-1,) + img_kd.shape[2:])
    pts_kd = pts_kd.reshape((-1,) + pts_kd.shape[2:])
    return img_kd, pts_kd


# ---------------------------------------------------------------------------
# Kernel 2: get_inter_channel_loss (default return path, f32 as under @force_fp32).
# ---------------------------------------------------------------------------
def _inter_channel_kernel(img_ref, pts_ref, loss_ref):
    _, Cp, Nsp = img_ref.shape
    x = img_ref[...].reshape(Cp, Nsp)
    y = pts_ref[...].reshape(Cp, Nsp)
    dn = (((1,), (1,)), ((), ()))               # X @ X^T, contraction over samples
    gx = jax.lax.dot_general(x, x, dn, preferred_element_type=jnp.float32)
    gy = jax.lax.dot_general(y, y, dn, preferred_element_type=jnp.float32)
    nx = jnp.sqrt(jnp.sum(gx * gx, axis=-1, keepdims=True))
    ny = jnp.sqrt(jnp.sum(gy * gy, axis=-1, keepdims=True))
    d = gx / jnp.maximum(nx, 1e-12) - gy / jnp.maximum(ny, 1e-12)
    loss_ref[...] = jnp.full((1, 1, 128), jnp.sum(d * d), dtype=jnp.float32)


def inter_channel_loss_pallas(img_feats_kd, pts_feats_kd, inter_channel_weight):
    """img/pts_feats_kd: (B, C, ys, xs) sampled key-point features."""
    B, C, ys, xs = img_feats_kd.shape
    Ns = ys * xs
    Cp = _round_up(C, 8)
    Nsp = _round_up(Ns, 128)

    def prep(f):
        f = f.reshape(B, C, Ns).astype(jnp.float32)
        # zero padding keeps the gram, the row norms and the MSE sum exact
        return jnp.pad(f, ((0, 0), (0, Cp - C), (0, Nsp - Ns)))

    partial = pl.pallas_call(
        _inter_channel_kernel,
        out_shape=jax.ShapeDtypeStruct((B, 1, 128), jnp.float32),
        grid=(B,),
        in_specs=[pl.BlockSpec((1, Cp, Nsp), lambda b: (b, 0, 0)),
                  pl.BlockSpec((1, Cp, Nsp), lambda b: (b, 0, 0))],
        out_specs=pl.BlockSpec((1, 1, 128), lambda b: (b, 0, 0)),
        compiler_params=pltpu.CompilerParams(dimension_semantics=("parallel",)),
    )(prep(img_feats_kd), prep(pts_feats_kd))

    # mse_loss(reduction='none').sum(-1).mean() == total_sum / (B * C)
    return inter_channel_weight * jnp.sum(partial[:, 0, 0]) / (B * C)


def inter_channel_loss_ref(img_feats_kd, pts_feats_kd, inter_channel_weight):
    B, C, ys, xs = img_feats_kd.shape
    Ns = ys * xs
    x = img_feats_kd.reshape(B, C, Ns).astype(jnp.float32)
    y = pts_feats_kd.reshape(B, C, Ns).astype(jnp.float32)
    gx = jnp.einsum('bcn,bdn->bcd', x, x)
    gy = jnp.einsum('bcn,bdn->bcd', y, y)
    gx = gx / jnp.maximum(jnp.sqrt(jnp.sum(gx * gx, -1, keepdims=True)), 1e-12)
    gy = gy / jnp.maximum(jnp.sqrt(jnp.sum(gy * gy, -1, keepdims=True)), 1e-12)
    return inter_channel_weight * jnp.mean(jnp.sum((gx - gy) ** 2, -1))


# ---------------------------------------------------------------------------
# Kernel 3: MGD-style inner feature distillation (the inner_feats_loss branch).
# ---------------------------------------------------------------------------
def _mgd_kernel(s_ref, m_ref, t_ref, wa_ref, ba_ref,
                w1_ref, b1_ref, w2_ref, b2_ref, loss_ref, pad_ref):
    B, H, W, Cin = s_ref.shape
    Ct = t_ref.shape[3]
    HW = H * W

    # align (1x1 conv): one (B*HW, Cin) @ (Cin, Ct) bf16 matmul, f32 accumulation.
    s = s_ref[...].reshape(B * HW, Cin)
    aligned = jnp.dot(s, wa_ref[...], preferred_element_type=jnp.float32) + ba_ref[...]
    # spatial (H, W, 1) mask; the lane splat is XLU work hidden under the matmuls.
    masked = (aligned.reshape(B, H, W, Ct) * m_ref[...]).astype(jnp.bfloat16)

    # Re-zero only the 1-wide border ring of the bf16 pad scratch; the interior is
    # fully overwritten below (no carried state -> batch axis stays "parallel").
    pad_ref[:, 0:1, :, :] = jnp.zeros((B, 1, W + 2, Ct), jnp.bfloat16)
    pad_ref[:, H + 1:H + 2, :, :] = jnp.zeros((B, 1, W + 2, Ct), jnp.bfloat16)
    pad_ref[:, 1:H + 1, 0:1, :] = jnp.zeros((B, H, 1, Ct), jnp.bfloat16)
    pad_ref[:, 1:H + 1, W + 1:W + 2, :] = jnp.zeros((B, H, 1, Ct), jnp.bfloat16)

    def conv3x3(b, w_ref, bias_ref):
        # 3x3 "SAME" conv as 9 accumulated K=Ct matmuls on shifted bf16 views of the
        # pad scratch (no im2col patch buffer, no (HW, 9*Ct) f32 intermediate).
        acc = jnp.zeros((HW, Ct), jnp.float32)
        for dy in range(3):
            for dx in range(3):
                tap = pad_ref[b:b + 1, dy:dy + H, dx:dx + W, :].reshape(HW, Ct)
                w_tap = w_ref[(3 * dy + dx) * Ct:(3 * dy + dx + 1) * Ct, :]
                acc = acc + jnp.dot(tap, w_tap, preferred_element_type=jnp.float32)
        return acc + bias_ref[...]

    total = jnp.zeros((), jnp.float32)
    for b in range(B):  # images folded into this grid step (static unroll)
        pad_ref[b:b + 1, 1:H + 1, 1:W + 1, :] = masked[b:b + 1]
        hidden = jnp.maximum(conv3x3(b, w1_ref, b1_ref), 0.0)
        pad_ref[b:b + 1, 1:H + 1, 1:W + 1, :] = (
            hidden.reshape(1, H, W, Ct).astype(jnp.bfloat16))
        new_fea = conv3x3(b, w2_ref, b2_ref)
        # teacher travels in bf16 and is upcast only here.
        diff = new_fea - t_ref[b:b + 1].reshape(HW, Ct).astype(jnp.float32)
        total = total + jnp.sum(diff * diff)

    loss_ref[...] = jnp.full((1, 1, 128), total, dtype=jnp.float32)


def init_mgd_params(Cs, Ct, seed=42):
    """Synthetic MGD FeatureLoss parameters: align 1x1 conv (Cs->Ct) stored as (Cs, Ct),
    generation = 3x3 conv (HWIO) -> ReLU -> 3x3 conv (HWIO), biases as (1, Ct)."""
    ks = jax.random.split(jax.random.PRNGKey(seed), 6)
    wa = jax.random.normal(ks[0], (Cs, Ct), jnp.float32) * 0.1
    ba = jax.random.normal(ks[1], (1, Ct), jnp.float32) * 0.1
    w1 = jax.random.normal(ks[2], (3, 3, Ct, Ct), jnp.float32) * 0.1
    b1 = jax.random.normal(ks[3], (1, Ct), jnp.float32) * 0.1
    w2 = jax.random.normal(ks[4], (3, 3, Ct, Ct), jnp.float32) * 0.1
    b2 = jax.random.normal(ks[5], (1, Ct), jnp.float32) * 0.1
    return wa, ba, w1, b1, w2, b2


def prepare_mgd_params(params):
    """One-time param prep: zero-pad channels to lane-dense multiples of 128 (padded
    rows/cols/biases MUST stay zero for exactness), reshape 3x3 weights to the tap-major
    (9*C, C) layout, cast MXU operands to bf16 (biases stay f32)."""
    wa, ba, w1, b1, w2, b2 = params
    Cin, Ct = wa.shape
    Cip, Ctp = _round_up(Cin, 128), _round_up(Ct, 128)
    wa_p = jnp.pad(wa, ((0, Cip - Cin), (0, Ctp - Ct))).astype(jnp.bfloat16)
    ba_p = jnp.pad(ba, ((0, 0), (0, Ctp - Ct))).astype(jnp.float32)
    w1_p = jnp.pad(w1, ((0, 0), (0, 0), (0, Ctp - Ct), (0, Ctp - Ct))
                   ).reshape(9 * Ctp, Ctp).astype(jnp.bfloat16)
    b1_p = jnp.pad(b1, ((0, 0), (0, Ctp - Ct))).astype(jnp.float32)
    w2_p = jnp.pad(w2, ((0, 0), (0, 0), (0, Ctp - Ct), (0, Ctp - Ct))
                   ).reshape(9 * Ctp, Ctp).astype(jnp.bfloat16)
    b2_p = jnp.pad(b2, ((0, 0), (0, Ctp - Ct))).astype(jnp.float32)
    return wa_p, ba_p, w1_p, b1_p, w2_p, b2_p


def _mgd_vmem_bytes(bb, H, W, Cip, Ctp):
    f32, bf16 = 4, 2
    stream = 2 * bb * H * W * (Cip * bf16 + 1 * f32 + Ctp * bf16)   # 2x-buffered s, m, t
    wmul = 1 if _SINGLE_BUFFER_WEIGHTS else 2
    weights = wmul * (Cip * Ctp * bf16 + Ctp * f32
                      + 2 * (9 * Ctp * Ctp * bf16 + Ctp * f32))
    scratch = bb * (H + 2) * (W + 2) * Ctp * bf16
    out = 2 * 128 * f32
    return stream + weights + scratch + out


def mgd_feature_loss(preds_S, preds_T, mask, prepared_params, alpha_mgd, *,
                     batch_block=1):
    """MGD-style FeatureLoss forward (the optional inner_feats_loss branch).
    preds_S: (N, Cs, H, W), preds_T: (N, Ct, H, W), mask: (N, 1, H, W). jit-compatible."""
    wa_p, ba_p, w1_p, b1_p, w2_p, b2_p = prepared_params
    N, Cs, H, W = preds_S.shape
    Ct = preds_T.shape[1]
    Cip, Ctp = wa_p.shape
    assert N % batch_block == 0, "batch_block must divide the batch"
    G = N // batch_block

    # NCHW -> NHWC, zero-pad channels to the lane-dense padded widths; the student and
    # teacher streams travel in bf16, the (H, W, 1) mask stays f32.
    s = jnp.transpose(preds_S, (0, 2, 3, 1)).astype(jnp.float32)
    s = jnp.pad(s, ((0, 0), (0, 0), (0, 0), (0, Cip - Cs))).astype(jnp.bfloat16)
    t = jnp.transpose(preds_T, (0, 2, 3, 1)).astype(jnp.float32)
    t = jnp.pad(t, ((0, 0), (0, 0), (0, 0), (0, Ctp - Ct))).astype(jnp.bfloat16)
    m = jnp.transpose(mask, (0, 2, 3, 1)).astype(jnp.float32)

    vmem_limit = int(max(32 * 2 ** 20,
                         1.25 * _mgd_vmem_bytes(batch_block, H, W, Cip, Ctp)))

    partial = pl.pallas_call(
        _mgd_kernel,
        out_shape=jax.ShapeDtypeStruct((G, 1, 128), jnp.float32),
        grid=(G,),
        in_specs=[
            pl.BlockSpec((batch_block, H, W, Cip), lambda g: (g, 0, 0, 0)),
            pl.BlockSpec((batch_block, H, W, 1), lambda g: (g, 0, 0, 0)),
            pl.BlockSpec((batch_block, H, W, Ctp), lambda g: (g, 0, 0, 0)),
            _const_spec((Cip, Ctp)),
            _const_spec((1, Ctp)),
            _const_spec((9 * Ctp, Ctp)),
            _const_spec((1, Ctp)),
            _const_spec((9 * Ctp, Ctp)),
            _const_spec((1, Ctp)),
        ],
        out_specs=pl.BlockSpec((1, 1, 128), lambda g: (g, 0, 0)),
        scratch_shapes=[pltpu.VMEM((batch_block, H + 2, W + 2, Ctp), jnp.bfloat16)],
        compiler_params=pltpu.CompilerParams(
            dimension_semantics=("parallel",), vmem_limit_bytes=vmem_limit),
    )(s, m, t, wa_p, ba_p, w1_p, b1_p, w2_p, b2_p)

    return jnp.sum(partial[:, 0, 0]) / N * alpha_mgd


def mgd_feature_loss_ref(preds_S, preds_T, mask, params, alpha_mgd):
    wa, ba, w1, b1, w2, b2 = params
    N = preds_T.shape[0]
    s = jnp.transpose(preds_S, (0, 2, 3, 1)).astype(jnp.float32)
    t = jnp.transpose(preds_T, (0, 2, 3, 1)).astype(jnp.float32)
    m = jnp.transpose(mask, (0, 2, 3, 1)).astype(jnp.float32)
    aligned = jnp.einsum('nhwc,cd->nhwd', s, wa) + ba[0]
    masked = aligned * m
    dn = jax.lax.conv_dimension_numbers(masked.shape, w1.shape,
                                        ('NHWC', 'HWIO', 'NHWC'))
    h = jax.lax.conv_general_dilated(masked, w1, (1, 1), 'SAME',
                                     dimension_numbers=dn) + b1[0]
    h = jnp.maximum(h, 0.0)
    new = jax.lax.conv_general_dilated(h, w2, (1, 1), 'SAME',
                                       dimension_numbers=dn) + b2[0]
    return jnp.sum((new - t) ** 2) / N * alpha_mgd


# ---------------------------------------------------------------------------
if __name__ == "__main__":
    key = jax.random.PRNGKey(0)
    ks = jax.random.split(key, 10)

    # Small shapes consistent with the module (batch=2, student C=4, teacher C=8, 16x16
    # BEV map, 8x8 key-point samples, 3 gt boxes per sample).
    N, Cs, Ct, H, W = 2, 4, 8, 16, 16
    x_sample_num = y_sample_num = 8
    num_boxes = 3
    inter_channel_weight = 10.0
    alpha_mgd, lambda_mgd = 2e-5, 0.65

    student_feats = jax.random.normal(ks[0], (N, Cs, H, W), jnp.float32)
    teacher_feats = jax.random.normal(ks[1], (N, Ct, H, W), jnp.float32)

    # imgbev_embed parameters (1x1 conv weight stored (Cs, Ct)) + BN running stats.
    emb_w = jax.random.normal(ks[2], (Cs, Ct), jnp.float32) * 0.3
    bn_gamma = 1.0 + 0.1 * jax.random.normal(ks[3], (Ct,), jnp.float32)
    bn_beta = 0.1 * jax.random.normal(ks[4], (Ct,), jnp.float32)
    bn_mean = 0.1 * jax.random.normal(ks[5], (Ct,), jnp.float32)
    bn_var = jnp.abs(1.0 + 0.1 * jax.random.normal(ks[6], (Ct,), jnp.float32))

    # img_view_transformer cfg (BEV grid) + synthetic rotated-box 2D corners.
    bx = jnp.array([-3.75, -3.75], jnp.float32)
    dx = jnp.array([0.5, 0.5], jnp.float32)
    nx = jnp.array([float(W), float(H)], jnp.float32)
    centers = jax.random.uniform(ks[7], (N, num_boxes, 2), jnp.float32, -2.0, 2.0)
    half = jax.random.uniform(ks[8], (N, num_boxes, 2), jnp.float32, 0.5, 1.5)
    ang = jax.random.uniform(ks[9], (N, num_boxes), jnp.float32, -0.3, 0.3)
    ca, sa = jnp.cos(ang), jnp.sin(ang)
    rot = jnp.stack([jnp.stack([ca, -sa], -1), jnp.stack([sa, ca], -1)], -2)
    offs = jnp.array([[-1., -1.], [1., -1.], [-1., 1.], [1., 1.]], jnp.float32)
    local = offs[None, None, :, :] * half[:, :, None, :]
    corners2d = centers[:, :, None, :] + jnp.einsum('nbij,nbkj->nbki', rot, local)

    # ---------------- Path A: default config (inner_feats_distill=None) -------------
    emb_w_p, emb_b_p = prepare_embed_params(emb_w, bn_gamma, bn_beta, bn_mean, bn_var)
    student_emb = imgbev_embed_pallas(student_feats, emb_w_p, emb_b_p, out_channels=Ct)
    img_kd, pts_kd = get_inner_feat(corners2d, student_emb, teacher_feats,
                                    x_sample_num=x_sample_num,
                                    y_sample_num=y_sample_num, bx=bx, dx=dx, nx=nx)
    loss_inter_channel = inter_channel_loss_pallas(img_kd, pts_kd, inter_channel_weight)
    loss_inter_channel = jax.block_until_ready(loss_inter_channel)

    scale = bn_gamma / jnp.sqrt(bn_var + 1e-5)
    shift = bn_beta - bn_mean * scale
    student_emb_ref = (jnp.einsum('nchw,cd->ndhw', student_feats, emb_w)
                       * scale[None, :, None, None] + shift[None, :, None, None])
    img_kd_r, pts_kd_r = get_inner_feat(corners2d, student_emb_ref, teacher_feats,
                                        x_sample_num=x_sample_num,
                                        y_sample_num=y_sample_num, bx=bx, dx=dx, nx=nx)
    loss_inter_channel_ref = inter_channel_loss_ref(img_kd_r, pts_kd_r,
                                                    inter_channel_weight)
    assert jnp.allclose(loss_inter_channel, loss_inter_channel_ref,
                        rtol=2e-2, atol=1e-6), (loss_inter_channel,
                                                loss_inter_channel_ref)

    # --------- Path B: inner_feats_distill configured (MGD-style feature loss) ------
    mgd_params = init_mgd_params(Ct, Ct)
    mgd_prepared = prepare_mgd_params(mgd_params)          # hoisted: runs once
    B_kd = img_kd.shape[0]
    u = jax.random.uniform(jax.random.PRNGKey(1),
                           (B_kd, 1, y_sample_num, x_sample_num), jnp.float32)
    mgd_mask = jnp.where(u > 1.0 - lambda_mgd, 0.0, 1.0)
    mgd_loss_fn = jax.jit(mgd_feature_loss, static_argnames=("batch_block",))
    loss_inner_feats = mgd_loss_fn(img_kd, pts_kd, mgd_mask, mgd_prepared, alpha_mgd,
                                   batch_block=3)
    loss_inner_feats = jax.block_until_ready(loss_inner_feats)
    loss_inner_feats_ref = mgd_feature_loss_ref(img_kd, pts_kd, mgd_mask, mgd_params,
                                                alpha_mgd)
    assert jnp.allclose(loss_inner_feats, loss_inner_feats_ref,
                        rtol=5e-2, atol=1e-9), (loss_inner_feats, loss_inner_feats_ref)

    print("KERNEL_OK")
</pallas_src>

<mosaic_0001>
module attributes {stable_mosaic.version = 11 : i64} {
  func.func @_copy(%arg0: i32, %arg1: memref<8x128xf32, #tpu.memory_space<vmem>>, %arg2: memref<8x128xf32, #tpu.memory_space<vmem>>) attributes {dimension_semantics = [#tpu.dimension_semantics<arbitrary>], iteration_bounds = array<i64: 2>, scalar_prefetch = 0 : i64, scratch_operands = 0 : i64, tpu.core_type = #tpu.core_type<tc>, window_params = [{pipeline_mode = #tpu.pipeline_mode<synchronous>, transform_indices = @transform_0, window_bounds = array<i64: 8, 128>}, {transform_indices = @transform_1, window_bounds = array<i64: 8, 128>}]} {
    %c0 = arith.constant 0 : index
    %c0_0 = arith.constant 0 : index
    %0 = vector.load %arg1[%c0, %c0_0] : memref<8x128xf32, #tpu.memory_space<vmem>>, vector<8x128xf32>
    %cst = arith.constant 1.000000e+00 : f32
    %1 = vector.broadcast %cst : f32 to vector<8x128xf32>
    %2 = arith.mulf %0, %1 : vector<8x128xf32>
    %c0_1 = arith.constant 0 : index
    %c0_2 = arith.constant 0 : index
    %3 = vector.load %arg2[%c0_1, %c0_2] : memref<8x128xf32, #tpu.memory_space<vmem>>, vector<8x128xf32>
    tpu.vector_store %arg2[%c0_1, %c0_2], %2 {strides = array<i32>} : memref<8x128xf32, #tpu.memory_space<vmem>>, vector<8x128xf32>,
    return
  }
  func.func @transform_0(%arg0: i32) -> (i32, i32) {
    %c0_i32 = arith.constant 0 : i32
    %c0_i32_0 = arith.constant 0 : i32
    %c0_i32_1 = arith.constant 0 : i32
    return %c0_i32, %c0_i32_0 : i32, i32
  }
  func.func @transform_1(%arg0: i32) -> (i32, i32) {
    %c0_i32 = arith.constant 0 : i32
    %c0_i32_0 = arith.constant 0 : i32
    return %arg0, %c0_i32 : i32, i32
  }
}

module attributes {stable_mosaic.version = 11 : i64} {
  func.func @_embed_kernel(%arg0: i32, %arg1: memref<1x16x16x128xf32, #tpu.memory_space<vmem>>, %arg2: memref<128x128xf32, #tpu.memory_space<vmem>>, %arg3: memref<1x128xf32, #tpu.memory_space<vmem>>, %arg4: memref<1x16x16x128xf32, #tpu.memory_space<vmem>>) attributes {dimension_semantics = [#tpu.dimension_semantics<parallel>], iteration_bounds = array<i64: 2>, scalar_prefetch = 0 : i64, scratch_operands = 0 : i64, tpu.core_type = #tpu.core_type<tc>, window_params = [{transform_indices = @transform_0, window_bounds = array<i64: 1, 16, 16, 128>}, {pipeline_mode = #tpu.pipeline_mode<synchronous>, transform_indices = @transform_1, window_bounds = array<i64: 128, 128>}, {pipeline_mode = #tpu.pipeline_mode<synchronous>, transform_indices = @transform_2, window_bounds = array<i64: 1, 128>}, {transform_indices = @transform_3, window_bounds = array<i64: 1, 16, 16, 128>}]} {
    %c0 = arith.constant 0 : index
    %c0_0 = arith.constant 0 : index
    %c0_1 = arith.constant 0 : index
    %c0_2 = arith.constant 0 : index
    %0 = vector.load %arg1[%c0, %c0_0, %c0_1, %c0_2] : memref<1x16x16x128xf32, #tpu.memory_space<vmem>>, vector<1x16x16x128xf32>
    %1 = vector.shape_cast %0 : vector<1x16x16x128xf32> to vector<256x128xf32>
    %c0_3 = arith.constant 0 : index
    %c0_4 = arith.constant 0 : index
    %2 = vector.load %arg2[%c0_3, %c0_4] : memref<128x128xf32, #tpu.memory_space<vmem>>, vector<128x128xf32>
    %cst = arith.constant dense<0.000000e+00> : vector<256x128xf32>
    %3 = tpu.matmul %1, %2, %cst {dimension_numbers = #tpu.dot_dimension_numbers<[1], [0], [0], [1], [0, 0, 1, 1], [], []>} : vector<256x128xf32>, vector<128x128xf32>, vector<256x128xf32> -> vector<256x128xf32>
    %c0_5 = arith.constant 0 : index
    %c0_6 = arith.constant 0 : index
    %4 = vector.load %arg3[%c0_5, %c0_6] : memref<1x128xf32, #tpu.memory_space<vmem>>, vector<1x128xf32>
    %5 = vector.broadcast %4 : vector<1x128xf32> to vector<256x128xf32>
    %6 = arith.addf %3, %5 : vector<256x128xf32>
    %7 = vector.shape_cast %6 : vector<256x128xf32> to vector<1x16x16x128xf32>
    %c0_7 = arith.constant 0 : index
    %c0_8 = arith.constant 0 : index
    %c0_9 = arith.constant 0 : index
    %c0_10 = arith.constant 0 : index
    %8 = vector.load %arg4[%c0_7, %c0_8, %c0_9, %c0_10] : memref<1x16x16x128xf32, #tpu.memory_space<vmem>>, vector<1x16x16x128xf32>
    tpu.vector_store %arg4[%c0_7, %c0_8, %c0_9, %c0_10], %7 {strides = array<i32>} : memref<1x16x16x128xf32, #tpu.memory_space<vmem>>, vector<1x16x16x128xf32>,
    return
  }
  func.func @transform_0(%arg0: i32) -> (i32, i32, i32, i32) {
    %c0_i32 = arith.constant 0 : i32
    %c0_i32_0 = arith.constant 0 : i32
    %c0_i32_1 = arith.constant 0 : i32
    %c0_i32_2 = arith.constant 0 : i32
    return %arg0, %c0_i32, %c0_i32_0, %c0_i32_1 : i32, i32, i32, i32
  }
  func.func @transform_1(%arg0: i32) -> (i32, i32) {
    %c0_i32 = arith.constant 0 : i32
    %c0_i32_0 = arith.constant 0 : i32
    %c0_i32_1 = arith.constant 0 : i32
    return %c0_i32, %c0_i32_0 : i32, i32
  }
  func.func @transform_2(%arg0: i32) -> (i32, i32) {
    %c0_i32 = arith.constant 0 : i32
    %c0_i32_0 = arith.constant 0 : i32
    %c0_i32_1 = arith.constant 0 : i32
    return %c0_i32, %c0_i32_0 : i32, i32
  }
  func.func @transform_3(%arg0: i32) -> (i32, i32, i32, i32) {
    %c0_i32 = arith.constant 0 : i32
    %c0_i32_0 = arith.constant 0 : i32
    %c0_i32_1 = arith.constant 0 : i32
    %c0_i32_2 = arith.constant 0 : i32
    return %arg0, %c0_i32, %c0_i32_0, %c0_i32_1 : i32, i32, i32, i32
  }
}

</mosaic_0001>

<llo_original>
// kernel: tpu_custom_call.1
$region0: #{tpu_custom_call.1}
  #allocation0 [shape = 'u32[]', space=smem, size = 0x4, offset = 0x4, fixed_abs, tag = 'smem constant byte address 0x4 - core index']
  #allocation1 [shape = 'u32[72,128]{1,0:T(1,128)}', space=vmem, size = 0x9000, scoped, tag = 'internal scratch']
  %s0 = inlined_call_operand.hbm [shape: f32[8,128], index: 0, kind: input, shape index: {}]
  %s1 = inlined_call_operand.hbm [shape: f32[16,128], index: 1, kind: output, shape index: {}]
  %s2 = sld [smem:[#allocation0]]
  $region41: #{tpu_custom_call.1} parent=0
    _
  %s4 = ssub.s32 1, %s2
  %s5 = scalar_select 0, %s4, %s2
  $region1: #{tpu_custom_call.1} parent=0
    #allocation2 [shape = 'u8[4096]{0}', space=vmem, size = 0x1000, scoped, tag = 'input window, operand 0, single buffered']
    #allocation3 [shape = 's32[2]{0}', space=sflag, size = 0x8, scoped, tag = 'scoped memory for tpu_custom_call.1']
    #allocation4 [shape = 's32[2]{0}', space=sflag, size = 0x8, scoped, tag = 'scoped memory for tpu_custom_call.1']
    #allocation5 [shape = 'u8[8192]{0}', space=vmem, size = 0x2000, scoped, tag = 'output window, operand 0']
    %6 = vsyncpa [#allocation3], 0
    %7 = vsyncpa [#allocation4], 0
    %s8 = scalar_lea.sflag [#allocation4], 1
    %9 = vsyncpa %s8, 0
    loop: start=0, step=1, limit=4
    $region2: #{tpu_custom_call.1} parent=1 // loop_pre_header
      _
    $region3: #{tpu_custom_call.1} parent=1 // loop_header
      %s11 = sphi 0, %s15
      %p12 = scmp.ge.s32.totalorder %s11, 4
      %s19 = sphi 0, %s19
      %s21 = sphi 0, %s19
      %s22 = sphi 0, %s21
      %s36 = sphi 0, %s22
      %s42 = sphi 0, %s44
      %s45 = sphi 0, %s42
      %s46 = sphi 0, %s45
      %s62 = sphi 0, %s46
    $region4: #{tpu_custom_call.1} parent=1 // loop_header_branch
      %14 = sbr.rel (%p12) target = $region8
    $region5: #{tpu_custom_call.1} parent=1 // loop_body
      %s16 = ssub.s32 %s11, 1
      %s17 = ssub.s32 %s11, 2
      %s18 = sadd.s32 %s11, 1
      %s20 = sadd.s32 %s19, 1
      %p23 = scmp.eq.s32.totalorder %s11, 1
      %p24 = scmp.ne.s32.totalorder %s19, %s21
      %p25 = scmp.eq.s32.totalorder %s11, 0
      %p26 = por %p24, %p25
      %p27 = scmp.ne.s32.totalorder %s19, %s21
      %p28 = scmp.eq.s32.totalorder %s16, 1
      %p29 = por %p27, %p28
      %p30 = scmp.ne.s32.totalorder %s21, %s22
      %p31 = scmp.eq.s32.totalorder %s16, 0
      %p32 = por %p30, %p31
      %p33 = scmp.ne.s32.totalorder %s21, %s22
      %p34 = scmp.eq.s32.totalorder %s17, 1
      %p35 = por %p33, %p34
      %p37 = scmp.ne.s32.totalorder %s22, %s36
      %p38 = scmp.eq.s32.totalorder %s17, 0
      %p39 = por %p37, %p38
      %s40 = ssub.s32 %s11, %s18
      %p41 = scmp.eq.s32.totalorder %s40, 0
      %s43 = sadd.s32 %s42, 1
      %s44 = scalar_select %p41, %s42, %s43
      %p47 = pneg %p41
      %p48 = scmp.eq.s32.totalorder %s11, 1
      %p49 = por %p47, %p48
      %p50 = scmp.ne.s32.totalorder %s42, %s45
      %p51 = scmp.eq.s32.totalorder %s11, 0
      %p52 = por %p50, %p51
      %p53 = scmp.ne.s32.totalorder %s42, %s45
      %p54 = scmp.eq.s32.totalorder %s16, 1
      %p55 = por %p53, %p54
      %p56 = scmp.ne.s32.totalorder %s45, %s46
      %p57 = scmp.eq.s32.totalorder %s16, 0
      %p58 = por %p56, %p57
      %p59 = scmp.ne.s32.totalorder %s45, %s46
      %p60 = scmp.eq.s32.totalorder %s17, 1
      %p61 = por %p59, %p60
      %p63 = scmp.ne.s32.totalorder %s46, %s62
      %p64 = scmp.eq.s32.totalorder %s17, 0
      %p65 = por %p63, %p64
      %p66 = scmp.le.s32.totalorder 1, %s11
      %p67 = scmp.lt.s32.totalorder %s11, 3
      %p68 = pnand %p66, %p67
      %p69 = pneg %p68
      // Predicated region
      $region9: #{tpu_custom_call.1} parent=5 // pred_check
        _
      $region10: #{tpu_custom_call.1} parent=5 // pred_check_branch
        %71 = sbr.rel (%p68) target = $region12
      $region11: #{tpu_custom_call.1} parent=5 // pred_region
        %s72 = ssub.s32 %s11, 1
        // Predicated region
        $region13: #{tpu_custom_call.1} parent=11 // pred_check
          %p73 = pneg %p32
        $region14: #{tpu_custom_call.1} parent=11 // pred_check_branch
          %75 = sbr.rel (%p73) target = $region16
        $region15: #{tpu_custom_call.1} parent=11 // pred_region
          %77 = vsyncadd [#allocation3], 0
          %s79 = sshll.u32 %s0, 4
          %s80 = int_to_ptr.hbm [resolvable:$true] %s79
          %s81 = sshll.u32 [#allocation2], 4
          %s82 = int_to_ptr.vmem [resolvable:$true] %s81
          %84 = dma.hbm_to_vmem [thread:$0]  %s80, 128, %s82, [#allocation3]
        $region16: #{tpu_custom_call.1} parent=11 // pred_fallthru
          _
      $region12: #{tpu_custom_call.1} parent=5 // pred_fallthru
        _
      %p85 = scmp.lt.s32.totalorder %s11, 2
      // Predicated region
      $region17: #{tpu_custom_call.1} parent=5 // pred_check
        %p86 = pneg %p85
      $region18: #{tpu_custom_call.1} parent=5 // pred_check_branch
        %88 = sbr.rel (%p86) target = $region20
      $region19: #{tpu_custom_call.1} parent=5 // pred_region
        _
      $region20: #{tpu_custom_call.1} parent=5 // pred_fallthru
        _
      %p89 = scmp.le.s32.totalorder 1, %s11
      %p90 = scmp.lt.s32.totalorder %s11, 3
      %p91 = pnand %p89, %p90
      %p92 = pneg %p91
      // Predicated region
      $region21: #{tpu_custom_call.1} parent=5 // pred_check
        _
      $region22: #{tpu_custom_call.1} parent=5 // pred_check_branch
        %94 = sbr.rel (%p91) target = $region24
      $region23: #{tpu_custom_call.1} parent=5 // pred_region
        %s95 = ssub.s32 %s11, 1
        // Predicated region
        $region25: #{tpu_custom_call.1} parent=23 // pred_check
          %p96 = pneg %p32
        $region26: #{tpu_custom_call.1} parent=23 // pred_check_branch
          %98 = sbr.rel (%p96) target = $region28
        $region27: #{tpu_custom_call.1} parent=23 // pred_region
          %100 = dma.done [#allocation3], 128
        $region28: #{tpu_custom_call.1} parent=23 // pred_fallthru
          _
        %p101 = pneg %p32
        %p102 = pneg %p29
        %p103 = pneg %p58
        %p104 = pneg %p55
        %s105 = sand.u32 %s45, 1
        %s106 = scalar_lea.sflag [#allocation4], %s105
        %s107 = sand.u32 %s45, 1
        %s108 = smul.addr %s107, 8
        %s109 = scalar_lea.vmem [#allocation5], %s108
        %v110 = vld [vmem:[#allocation2] sm:$0xff]
        %111 = vst [vmem:[%s109] sm:$0xff] %v110
        %s112 = sand.u32 %s45, 1
        %s113 = scalar_lea.sflag [#allocation4], %s112
        %s114 = sand.u32 %s45, 1
        %s115 = smul.addr %s114, 8
        %s116 = scalar_lea.vmem [#allocation5], %s115
        // Predicated region
        $region29: #{tpu_custom_call.1} parent=23 // pred_check
          %p117 = pneg %p55
        $region30: #{tpu_custom_call.1} parent=23 // pred_check_branch
          %119 = sbr.rel (%p117) target = $region32
        $region31: #{tpu_custom_call.1} parent=23 // pred_region
          %121 = vsyncadd %s113, 0
          %s122 = smul.addr %s16, 8
          %s123 = scalar_lea.hbm %s1, %s122
          %s125 = sshll.u32 %s116, 4
          %s126 = int_to_ptr.vmem [resolvable:$true] %s125
          %s127 = sshll.u32 %s123, 4
          %s128 = int_to_ptr.hbm [resolvable:$true] %s127
          %130 = dma.vmem_to_hbm [thread:$0]  %s126, 128, %s128, %s113
        $region32: #{tpu_custom_call.1} parent=23 // pred_fallthru
          _
      $region24: #{tpu_custom_call.1} parent=5 // pred_fallthru
        _
      %p131 = scmp.le.s32.totalorder 2, %s11
      // Predicated region
      $region33: #{tpu_custom_call.1} parent=5 // pred_check
        %p132 = pneg %p131
      $region34: #{tpu_custom_call.1} parent=5 // pred_check_branch
        %134 = sbr.rel (%p132) target = $region36
      $region35: #{tpu_custom_call.1} parent=5 // pred_region
        %s135 = ssub.s32 %s11, 2
        // Predicated region
        $region37: #{tpu_custom_call.1} parent=35 // pred_check
          %p136 = pneg %p61
        $region38: #{tpu_custom_call.1} parent=35 // pred_check_branch
          %138 = sbr.rel (%p136) target = $region40
        $region39: #{tpu_custom_call.1} parent=35 // pred_region
          %s139 = sand.u32 %s46, 1
          %s140 = scalar_lea.sflag [#allocation4], %s139
          %s141 = sand.u32 %s46, 1
          %s142 = smul.addr %s141, 8
          %s143 = scalar_lea.vmem [#allocation5], %s142
          %145 = dma.done %s140, 128
        $region40: #{tpu_custom_call.1} parent=35 // pred_fallthru
          _
      $region36: #{tpu_custom_call.1} parent=5 // pred_fallthru
        _
    $region6: #{tpu_custom_call.1} parent=1 // loop_footer
      %s15 = sadd.s32 1, %s11
    $region7: #{tpu_custom_call.1} parent=1 // loop_footer_branch
      %10 = sbr.rel target = $region3
    $region8: #{tpu_custom_call.1} parent=1 // loop_exit
      _
    %146 = vsyncpa [#allocation3], 1
    %s147 = scalar_lea.sflag [#allocation3], 1
    %148 = vsyncpa %s147, 1
    %149 = vsyncpa [#allocation4], 1
    %s150 = scalar_lea.sflag [#allocation4], 1
    %151 = vsyncpa %s150, 1

// kernel: tpu_custom_call.1
$region0: #{tpu_custom_call.1}
  #allocation0 [shape = 'u32[]', space=smem, size = 0x4, offset = 0x4, fixed_abs, tag = 'smem constant byte address 0x4 - core index']
  #allocation1 [shape = 'u32[72,128]{1,0:T(1,128)}', space=vmem, size = 0x9000, scoped, tag = 'internal scratch']
  %s0 = inlined_call_operand.hbm [shape: f32[2,16,16,128], index: 0, kind: input, shape index: {}]
  %s1 = inlined_call_operand.hbm [shape: f32[128,128], index: 1, kind: input, shape index: {}]
  %s2 = inlined_call_operand.vmem [shape: f32[1,128], index: 2, kind: input, shape index: {}]
  %s3 = inlined_call_operand.hbm [shape: f32[2,16,16,128], index: 3, kind: output, shape index: {}]
  %s4 = sld [smem:[#allocation0]]
  $region53: #{tpu_custom_call.1} parent=0
    _
  %s6 = ssub.s32 1, %s4
  %s7 = scalar_select 0, %s6, %s4
  $region1: #{tpu_custom_call.1} parent=0
    #allocation2 [shape = 'u8[262144]{0}', space=vmem, size = 0x40000, scoped, tag = 'input window, operand 0']
    #allocation3 [shape = 's32[2]{0}', space=sflag, size = 0x8, scoped, tag = 'scoped memory for tpu_custom_call.1']
    #allocation4 [shape = 's32[2]{0}', space=sflag, size = 0x8, scoped, tag = 'scoped memory for tpu_custom_call.1']
    #allocation5 [shape = 'u8[65536]{0}', space=vmem, size = 0x10000, scoped, tag = 'input window, operand 1, single buffered']
    #allocation6 [shape = 's32[1]{0}', space=sflag, size = 0x4, scoped, tag = 'scoped memory for tpu_custom_call.1']
    #allocation7 [shape = 'u8[262144]{0}', space=vmem, size = 0x40000, scoped, tag = 'output window, operand 0']
    %8 = vsyncpa [#allocation3], 0
    %s9 = scalar_lea.sflag [#allocation3], 1
    %10 = vsyncpa %s9, 0
    %11 = vsyncpa [#allocation6], 0
    %12 = vsyncpa [#allocation4], 0
    %s13 = scalar_lea.sflag [#allocation4], 1
    %14 = vsyncpa %s13, 0
    loop: start=0, step=1, limit=4
    $region2: #{tpu_custom_call.1} parent=1 // loop_pre_header
      _
    $region3: #{tpu_custom_call.1} parent=1 // loop_header
      %s16 = sphi 0, %s20
      %p17 = scmp.ge.s32.totalorder %s16, 4
      %s26 = sphi 0, %s28
      %s29 = sphi 0, %s26
      %s30 = sphi 0, %s29
      %s46 = sphi 0, %s30
      %s50 = sphi 0, %s50
      %s52 = sphi 0, %s50
      %s53 = sphi 0, %s52
      %s67 = sphi 0, %s53
      %s71 = sphi 0, %s71
      %s73 = sphi 0, %s71
      %s74 = sphi 0, %s73
      %s88 = sphi 0, %s74
      %s94 = sphi 0, %s96
      %s97 = sphi 0, %s94
      %s98 = sphi 0, %s97
      %s114 = sphi 0, %s98
    $region4: #{tpu_custom_call.1} parent=1 // loop_header_branch
      %19 = sbr.rel (%p17) target = $region8
    $region5: #{tpu_custom_call.1} parent=1 // loop_body
      %s21 = ssub.s32 %s16, 1
      %s22 = ssub.s32 %s16, 2
      %s23 = sadd.s32 %s16, 1
      %s24 = ssub.s32 %s16, %s23
      %p25 = scmp.eq.s32.totalorder %s24, 0
      %s27 = sadd.s32 %s26, 1
      %s28 = scalar_select %p25, %s26, %s27
      %p31 = pneg %p25
      %p32 = scmp.eq.s32.totalorder %s16, 1
      %p33 = por %p31, %p32
      %p34 = scmp.ne.s32.totalorder %s26, %s29
      %p35 = scmp.eq.s32.totalorder %s16, 0
      %p36 = por %p34, %p35
      %p37 = scmp.ne.s32.totalorder %s26, %s29
      %p38 = scmp.eq.s32.totalorder %s21, 1
      %p39 = por %p37, %p38
      %p40 = scmp.ne.s32.totalorder %s29, %s30
      %p41 = scmp.eq.s32.totalorder %s21, 0
      %p42 = por %p40, %p41
      %p43 = scmp.ne.s32.totalorder %s29, %s30
      %p44 = scmp.eq.s32.totalorder %s22, 1
      %p45 = por %p43, %p44
      %p47 = scmp.ne.s32.totalorder %s30, %s46
      %p48 = scmp.eq.s32.totalorder %s22, 0
      %p49 = por %p47, %p48
      %s51 = sadd.s32 %s50, 1
      %p54 = scmp.eq.s32.totalorder %s16, 1
      %p55 = scmp.ne.s32.totalorder %s50, %s52
      %p56 = scmp.eq.s32.totalorder %s16, 0
      %p57 = por %p55, %p56
      %p58 = scmp.ne.s32.totalorder %s50, %s52
      %p59 = scmp.eq.s32.totalorder %s21, 1
      %p60 = por %p58, %p59
      %p61 = scmp.ne.s32.totalorder %s52, %s53
      %p62 = scmp.eq.s32.totalorder %s21, 0
      %p63 = por %p61, %p62
      %p64 = scmp.ne.s32.totalorder %s52, %s53
      %p65 = scmp.eq.s32.totalorder %s22, 1
      %p66 = por %p64, %p65
      %p68 = scmp.ne.s32.totalorder %s53, %s67
      %p69 = scmp.eq.s32.totalorder %s22, 0
      %p70 = por %p68, %p69
      %s72 = sadd.s32 %s71, 1
      %p75 = scmp.eq.s32.totalorder %s16, 1
      %p76 = scmp.ne.s32.totalorder %s71, %s73
      %p77 = scmp.eq.s32.totalorder %s16, 0
      %p78 = por %p76, %p77
      %p79 = scmp.ne.s32.totalorder %s71, %s73
      %p80 = scmp.eq.s32.totalorder %s21, 1
      %p81 = por %p79, %p80
      %p82 = scmp.ne.s32.totalorder %s73, %s74
      %p83 = scmp.eq.s32.totalorder %s21, 0
      %p84 = por %p82, %p83
      %p85 = scmp.ne.s32.totalorder %s73, %s74
      %p86 = scmp.eq.s32.totalorder %s22, 1
      %p87 = por %p85, %p86
      %p89 = scmp.ne.s32.totalorder %s74, %s88
      %p90 = scmp.eq.s32.totalorder %s22, 0
      %p91 = por %p89, %p90
      %s92 = ssub.s32 %s16, %s23
      %p93 = scmp.eq.s32.totalorder %s92, 0
      %s95 = sadd.s32 %s94, 1
      %s96 = scalar_select %p93, %s94, %s95
      %p99 = pneg %p93
      %p100 = scmp.eq.s32.totalorder %s16, 1
      %p101 = por %p99, %p100
      %p102 = scmp.ne.s32.totalorder %s94, %s97
      %p103 = scmp.eq.s32.totalorder %s16, 0
      %p104 = por %p102, %p103
      %p105 = scmp.ne.s32.totalorder %s94, %s97
      %p106 = scmp.eq.s32.totalorder %s21, 1
      %p107 = por %p105, %p106
      %p108 = scmp.ne.s32.totalorder %s97, %s98
      %p109 = scmp.eq.s32.totalorder %s21, 0
      %p110 = por %p108, %p109
      %p111 = scmp.ne.s32.totalorder %s97, %s98
      %p112 = scmp.eq.s32.totalorder %s22, 1
      %p113 = por %p111, %p112
      %p115 = scmp.ne.s32.totalorder %s98, %s114
      %p116 = scmp.eq.s32.totalorder %s22, 0
      %p117 = por %p115, %p116
      %p118 = scmp.le.s32.totalorder 1, %s16
      %p119 = scmp.lt.s32.totalorder %s16, 3
      %p120 = pnand %p118, %p119
      %p121 = pneg %p120
      // Predicated region
      $region9: #{tpu_custom_call.1} parent=5 // pred_check
        _
      $region10: #{tpu_custom_call.1} parent=5 // pred_check_branch
        %123 = sbr.rel (%p120) target = $region12
      $region11: #{tpu_custom_call.1} parent=5 // pred_region
        %s124 = ssub.s32 %s16, 1
        // Predicated region
        $region13: #{tpu_custom_call.1} parent=11 // pred_check
          %p125 = pneg %p63
        $region14: #{tpu_custom_call.1} parent=11 // pred_check_branch
          %127 = sbr.rel (%p125) target = $region16
        $region15: #{tpu_custom_call.1} parent=11 // pred_region
          %129 = vsyncadd [#allocation6], 0
          %s130 = sshll.u32 %s1, 4
          %s131 = int_to_ptr.hbm [resolvable:$true] %s130
          %s132 = sshll.u32 [#allocation5], 4
          %s133 = int_to_ptr.vmem [resolvable:$true] %s132
          %138 = dma.hbm_to_vmem [thread:$0]  %s131, 2048, %s133, [#allocation6], 128, 128, 8
        $region16: #{tpu_custom_call.1} parent=11 // pred_fallthru
          _
        // Predicated region
        $region17: #{tpu_custom_call.1} parent=11 // pred_check
          %p139 = pneg %p84
        $region18: #{tpu_custom_call.1} parent=11 // pred_check_branch
          %141 = sbr.rel (%p139) target = $region20
        $region19: #{tpu_custom_call.1} parent=11 // pred_region
          _
        $region20: #{tpu_custom_call.1} parent=11 // pred_fallthru
          _
      $region12: #{tpu_custom_call.1} parent=5 // pred_fallthru
        _
      %p142 = scmp.lt.s32.totalorder %s16, 2
      // Predicated region
      $region21: #{tpu_custom_call.1} parent=5 // pred_check
        %p143 = pneg %p142
      $region22: #{tpu_custom_call.1} parent=5 // pred_check_branch
        %145 = sbr.rel (%p143) target = $region24
      $region23: #{tpu_custom_call.1} parent=5 // pred_region
        // Predicated region
        $region25: #{tpu_custom_call.1} parent=23 // pred_check
          %p146 = pneg %p36
        $region26: #{tpu_custom_call.1} parent=23 // pred_check_branch
          %148 = sbr.rel (%p146) target = $region28
        $region27: #{tpu_custom_call.1} parent=23 // pred_region
          %s149 = sand.u32 %s26, 1
          %s150 = scalar_lea.sflag [#allocation3], %s149
          %s151 = sand.u32 %s26, 1
          %s152 = smul.addr %s151, 256
          %s153 = scalar_lea.vmem [#allocation2], %s152
          %155 = vsyncadd %s150, 0
          %s156 = smul.addr %s16, 32
          %s157 = smul.addr %s156, 8
          %s158 = scalar_lea.hbm %s0, %s157
          %s159 = sshll.u32 %s158, 4
          %s160 = int_to_ptr.hbm [resolvable:$true] %s159
          %s161 = sshll.u32 %s153, 4
          %s162 = int_to_ptr.vmem [resolvable:$true] %s161
          %167 = dma.hbm_to_vmem [thread:$0]  %s160, 4096, %s162, %s150, 128, 128, 8
        $region28: #{tpu_custom_call.1} parent=23 // pred_fallthru
          _
      $region24: #{tpu_custom_call.1} parent=5 // pred_fallthru
        _
      %p168 = scmp.le.s32.totalorder 1, %s16
      %p169 = scmp.lt.s32.totalorder %s16, 3
      %p170 = pnand %p168, %p169
      %p171 = pneg %p170
      // Predicated region
      $region29: #{tpu_custom_call.1} parent=5 // pred_check
        _
      $region30: #{tpu_custom_call.1} parent=5 // pred_check_branch
        %173 = sbr.rel (%p170) target = $region32
      $region31: #{tpu_custom_call.1} parent=5 // pred_region
        %s174 = ssub.s32 %s16, 1
        %s175 = sand.u32 %s29, 1
        %s176 = scalar_lea.sflag [#allocation3], %s175
        %s177 = sand.u32 %s29, 1
        %s178 = smul.addr %s177, 256
        %s179 = scalar_lea.vmem [#allocation2], %s178
        // Predicated region
        $region33: #{tpu_custom_call.1} parent=31 // pred_check
          %p180 = pneg %p42
        $region34: #{tpu_custom_call.1} parent=31 // pred_check_branch
          %182 = sbr.rel (%p180) target = $region36
        $region35: #{tpu_custom_call.1} parent=31 // pred_region
          %184 = dma.done %s176, 4096
        $region36: #{tpu_custom_call.1} parent=31 // pred_fallthru
          _
        // Predicated region
        $region37: #{tpu_custom_call.1} parent=31 // pred_check
          %p185 = pneg %p63
        $region38: #{tpu_custom_call.1} parent=31 // pred_check_branch
          %187 = sbr.rel (%p185) target = $region40
        $region39: #{tpu_custom_call.1} parent=31 // pred_region
          %189 = dma.done [#allocation6], 2048
        $region40: #{tpu_custom_call.1} parent=31 // pred_fallthru
          _
        %s190 = sand.u32 %s29, 1
        %s191 = scalar_lea.sflag [#allocation3], %s190
        %s192 = sand.u32 %s29, 1
        %s193 = smul.addr %s192, 256
        %s194 = scalar_lea.vmem [#allocation2], %s193
        %p195 = pneg %p42
        %p196 = pneg %p39
        %p197 = pneg %p63
        %p198 = pneg %p60
        %p199 = pneg %p84
        %p200 = pneg %p81
        %p201 = pneg %p110
        %p202 = pneg %p107
        %s203 = sand.u32 %s97, 1
        %s204 = scalar_lea.sflag [#allocation4], %s203
        %s205 = sand.u32 %s97, 1
        %s206 = smul.addr %s205, 256
        %s207 = scalar_lea.vmem [#allocation7], %s206
        %v208 = vld [vmem:[%s179] sm:$0xff]
        %v209 = vld [vmem:[%s179 + $0x8] sm:$0xff]
        %v210 = vld [vmem:[%s179 + $0x10] sm:$0xff]
        %v211 = vld [vmem:[%s179 + $0x18] sm:$0xff]
        %v212 = vld [vmem:[%s179 + $0x20] sm:$0xff]
        %v213 = vld [vmem:[%s179 + $0x28] sm:$0xff]
        %v214 = vld [vmem:[%s179 + $0x30] sm:$0xff]
        %v215 = vld [vmem:[%s179 + $0x38] sm:$0xff]
        %v216 = vld [vmem:[%s179 + $0x40] sm:$0xff]
        %v217 = vld [vmem:[%s179 + $0x48] sm:$0xff]
        %v218 = vld [vmem:[%s179 + $0x50] sm:$0xff]
        %v219 = vld [vmem:[%s179 + $0x58] sm:$0xff]
        %v220 = vld [vmem:[%s179 + $0x60] sm:$0xff]
        %v221 = vld [vmem:[%s179 + $0x68] sm:$0xff]
        %v222 = vld [vmem:[%s179 + $0x70] sm:$0xff]
        %v223 = vld [vmem:[%s179 + $0x78] sm:$0xff]
        %v224 = vld [vmem:[%s179 + $0x80] sm:$0xff]
        %v225 = vld [vmem:[%s179 + $0x88] sm:$0xff]
        %v226 = vld [vmem:[%s179 + $0x90] sm:$0xff]
        %v227 = vld [vmem:[%s179 + $0x98] sm:$0xff]
        %v228 = vld [vmem:[%s179 + $0xa0] sm:$0xff]
        %v229 = vld [vmem:[%s179 + $0xa8] sm:$0xff]
        %v230 = vld [vmem:[%s179 + $0xb0] sm:$0xff]
        %v231 = vld [vmem:[%s179 + $0xb8] sm:$0xff]
        %v232 = vld [vmem:[%s179 + $0xc0] sm:$0xff]
        %v233 = vld [vmem:[%s179 + $0xc8] sm:$0xff]
        %v234 = vld [vmem:[%s179 + $0xd0] sm:$0xff]
        %v235 = vld [vmem:[%s179 + $0xd8] sm:$0xff]
        %v236 = vld [vmem:[%s179 + $0xe0] sm:$0xff]
        %v237 = vld [vmem:[%s179 + $0xe8] sm:$0xff]
        %v238 = vld [vmem:[%s179 + $0xf0] sm:$0xff]
        %v239 = vld [vmem:[%s179 + $0xf8] sm:$0xff]
        %v240 = vld [vmem:[#allocation5] sm:$0xff]
        %v241 = vld [vmem:[#allocation5 + $0x8] sm:$0xff]
        %v242 = vld [vmem:[#allocation5 + $0x10] sm:$0xff]
        %v243 = vld [vmem:[#allocation5 + $0x18] sm:$0xff]
        %v244 = vld [vmem:[#allocation5 + $0x20] sm:$0xff]
        %v245 = vld [vmem:[#allocation5 + $0x28] sm:$0xff]
        %v246 = vld [vmem:[#allocation5 + $0x30] sm:$0xff]
        %v247 = vld [vmem:[#allocation5 + $0x38] sm:$0xff]
        %v248 = vld [vmem:[#allocation5 + $0x40] sm:$0xff]
        %v249 = vld [vmem:[#allocation5 + $0x48] sm:$0xff]
        %v250 = vld [vmem:[#allocation5 + $0x50] sm:$0xff]
        %v251 = vld [vmem:[#allocation5 + $0x58] sm:$0xff]
        %v252 = vld [vmem:[#allocation5 + $0x60] sm:$0xff]
        %v253 = vld [vmem:[#allocation5 + $0x68] sm:$0xff]
        %v254 = vld [vmem:[#allocation5 + $0x70] sm:$0xff]
        %v255 = vld [vmem:[#allocation5 + $0x78] sm:$0xff]
        %v256 = vld [vmem:[%s2] sm:$0x1]
        %v258 = vperm.slane %v256, 0
        %260 = vmatpush.msra.mxu0 %v255
        %261 = vmatpush.msra.mxu0 %v254
        %262 = vmatpush.msra.mxu0 %v253
        %263 = vmatpush.msra.mxu0 %v252
        %264 = vmatpush.msra.mxu0 %v251
        %265 = vmatpush.msra.mxu0 %v250
        %266 = vmatpush.msra.mxu0 %v249
        %267 = vmatpush.msra.mxu0 %v248
        %268 = vmatpush.msra.mxu0 %v247
        %269 = vmatpush.msra.mxu0 %v246
        %270 = vmatpush.msra.mxu0 %v245
        %271 = vmatpush.msra.mxu0 %v244
        %272 = vmatpush.msra.mxu0 %v243
        %273 = vmatpush.msra.mxu0 %v242
        %274 = vmatpush.msra.mxu0 %v241
        %275 = vmatpush.msra.mxu0 %v240
        %276 = vmatmul.f32.gmra.mxu0 %v208
        %v277 = vpop.f32.mrf.mxu0
        %v278 = vadd.f32 %v258, %v277
        %279 = vmatmul.f32.gmra.mxu0 %v209
        %v280 = vpop.f32.mrf.mxu0
        %v281 = vadd.f32 %v258, %v280
        %282 = vmatmul.f32.gmra.mxu0 %v210
        %v283 = vpop.f32.mrf.mxu0
        %v284 = vadd.f32 %v258, %v283
        %285 = vmatmul.f32.gmra.mxu0 %v211
        %v286 = vpop.f32.mrf.mxu0
        %v287 = vadd.f32 %v258, %v286
        %288 = vmatmul.f32.gmra.mxu0 %v212
        %v289 = vpop.f32.mrf.mxu0
        %v290 = vadd.f32 %v258, %v289
        %291 = vmatmul.f32.gmra.mxu0 %v213
        %v292 = vpop.f32.mrf.mxu0
        %v293 = vadd.f32 %v258, %v292
        %294 = vmatmul.f32.gmra.mxu0 %v214
        %v295 = vpop.f32.mrf.mxu0
        %v296 = vadd.f32 %v258, %v295
        %297 = vmatmul.f32.gmra.mxu0 %v215
        %v298 = vpop.f32.mrf.mxu0
        %v299 = vadd.f32 %v258, %v298
        %300 = vmatmul.f32.gmra.mxu0 %v216
        %v301 = vpop.f32.mrf.mxu0
        %v302 = vadd.f32 %v258, %v301
        %303 = vmatmul.f32.gmra.mxu0 %v217
        %v304 = vpop.f32.mrf.mxu0
        %v305 = vadd.f32 %v258, %v304
        %306 = vmatmul.f32.gmra.mxu0 %v218
        %v307 = vpop.f32.mrf.mxu0
        %v308 = vadd.f32 %v258, %v307
        %309 = vmatmul.f32.gmra.mxu0 %v219
        %v310 = vpop.f32.mrf.mxu0
        %v311 = vadd.f32 %v258, %v310
        %312 = vmatmul.f32.gmra.mxu0 %v220
        %v313 = vpop.f32.mrf.mxu0
        %v314 = vadd.f32 %v258, %v313
        %315 = vmatmul.f32.gmra.mxu0 %v221
        %v316 = vpop.f32.mrf.mxu0
        %v317 = vadd.f32 %v258, %v316
        %318 = vmatmul.f32.gmra.mxu0 %v222
        %v319 = vpop.f32.mrf.mxu0
        %v320 = vadd.f32 %v258, %v319
        %321 = vmatmul.f32.gmra.mxu0 %v223
        %v322 = vpop.f32.mrf.mxu0
        %v323 = vadd.f32 %v258, %v322
        %324 = vmatmul.f32.gmra.mxu0 %v224
        %v325 = vpop.f32.mrf.mxu0
        %v326 = vadd.f32 %v258, %v325
        %327 = vmatmul.f32.gmra.mxu0 %v225
        %v328 = vpop.f32.mrf.mxu0
        %v329 = vadd.f32 %v258, %v328
        %330 = vmatmul.f32.gmra.mxu0 %v226
        %v331 = vpop.f32.mrf.mxu0
        %v332 = vadd.f32 %v258, %v331
        %333 = vmatmul.f32.gmra.mxu0 %v227
        %v334 = vpop.f32.mrf.mxu0
        %v335 = vadd.f32 %v258, %v334
        %336 = vmatmul.f32.gmra.mxu0 %v228
        %v337 = vpop.f32.mrf.mxu0
        %v338 = vadd.f32 %v258, %v337
        %339 = vmatmul.f32.gmra.mxu0 %v229
        %v340 = vpop.f32.mrf.mxu0
        %v341 = vadd.f32 %v258, %v340
        %342 = vmatmul.f32.gmra.mxu0 %v230
        %v343 = vpop.f32.mrf.mxu0
        %v344 = vadd.f32 %v258, %v343
        %345 = vmatmul.f32.gmra.mxu0 %v231
        %v346 = vpop.f32.mrf.mxu0
        %v347 = vadd.f32 %v258, %v346
        %348 = vmatmul.f32.gmra.mxu0 %v232
        %v349 = vpop.f32.mrf.mxu0
        %v350 = vadd.f32 %v258, %v349
        %351 = vmatmul.f32.gmra.mxu0 %v233
        %v352 = vpop.f32.mrf.mxu0
        %v353 = vadd.f32 %v258, %v352
        %354 = vmatmul.f32.gmra.mxu0 %v234
        %v355 = vpop.f32.mrf.mxu0
        %v356 = vadd.f32 %v258, %v355
        %357 = vmatmul.f32.gmra.mxu0 %v235
        %v358 = vpop.f32.mrf.mxu0
        %v359 = vadd.f32 %v258, %v358
        %360 = vmatmul.f32.gmra.mxu0 %v236
        %v361 = vpop.f32.mrf.mxu0
        %v362 = vadd.f32 %v258, %v361
        %363 = vmatmul.f32.gmra.mxu0 %v237
        %v364 = vpop.f32.mrf.mxu0
        %v365 = vadd.f32 %v258, %v364
        %366 = vmatmul.f32.gmra.mxu0 %v238
        %v367 = vpop.f32.mrf.mxu0
        %v368 = vadd.f32 %v258, %v367
        %369 = vmatmul.f32.gmra.mxu0 %v239
        %v370 = vpop.f32.mrf.mxu0
        %v371 = vadd.f32 %v258, %v370
        %372 = vdwg.mxu0
        %373 = vst [vmem:[%s207] sm:$0xff] %v278
        %374 = vst [vmem:[%s207 + $0x8] sm:$0xff] %v281
        %375 = vst [vmem:[%s207 + $0x10] sm:$0xff] %v284
        %376 = vst [vmem:[%s207 + $0x18] sm:$0xff] %v287
        %377 = vst [vmem:[%s207 + $0x20] sm:$0xff] %v290
        %378 = vst [vmem:[%s207 + $0x28] sm:$0xff] %v293
        %379 = vst [vmem:[%s207 + $0x30] sm:$0xff] %v296
        %380 = vst [vmem:[%s207 + $0x38] sm:$0xff] %v299
        %381 = vst [vmem:[%s207 + $0x40] sm:$0xff] %v302
        %382 = vst [vmem:[%s207 + $0x48] sm:$0xff] %v305
        %383 = vst [vmem:[%s207 + $0x50] sm:$0xff] %v308
        %384 = vst [vmem:[%s207 + $0x58] sm:$0xff] %v311
        %385 = vst [vmem:[%s207 + $0x60] sm:$0xff] %v314
        %386 = vst [vmem:[%s207 + $0x68] sm:$0xff] %v317
        %387 = vst [vmem:[%s207 + $0x70] sm:$0xff] %v320
        %388 = vst [vmem:[%s207 + $0x78] sm:$0xff] %v323
        %389 = vst [vmem:[%s207 + $0x80] sm:$0xff] %v326
        %390 = vst [vmem:[%s207 + $0x88] sm:$0xff] %v329
        %391 = vst [vmem:[%s207 + $0x90] sm:$0xff] %v332
        %392 = vst [vmem:[%s207 + $0x98] sm:$0xff] %v335
        %393 = vst [vmem:[%s207 + $0xa0] sm:$0xff] %v338
        %394 = vst [vmem:[%s207 + $0xa8] sm:$0xff] %v341
        %395 = vst [vmem:[%s207 + $0xb0] sm:$0xff] %v344
        %396 = vst [vmem:[%s207 + $0xb8] sm:$0xff] %v347
        %397 = vst [vmem:[%s207 + $0xc0] sm:$0xff] %v350
        %398 = vst [vmem:[%s207 + $0xc8] sm:$0xff] %v353
        %399 = vst [vmem:[%s207 + $0xd0] sm:$0xff] %v356
        %400 = vst [vmem:[%s207 + $0xd8] sm:$0xff] %v359
        %401 = vst [vmem:[%s207 + $0xe0] sm:$0xff] %v362
        %402 = vst [vmem:[%s207 + $0xe8] sm:$0xff] %v365
        %403 = vst [vmem:[%s207 + $0xf0] sm:$0xff] %v368
        %404 = vst [vmem:[%s207 + $0xf8] sm:$0xff] %v371
        %s405 = sand.u32 %s97, 1
        %s406 = scalar_lea.sflag [#allocation4], %s405
        %s407 = sand.u32 %s97, 1
        %s408 = smul.addr %s407, 256
        %s409 = scalar_lea.vmem [#allocation7], %s408
        // Predicated region
        $region41: #{tpu_custom_call.1} parent=31 // pred_check
          %p410 = pneg %p107
        $region42: #{tpu_custom_call.1} parent=31 // pred_check_branch
          %412 = sbr.rel (%p410) target = $region44
        $region43: #{tpu_custom_call.1} parent=31 // pred_region
          %414 = vsyncadd %s406, 0
          %s415 = smul.addr %s21, 32
          %s416 = smul.addr %s415, 8
          %s417 = scalar_lea.hbm %s3, %s416
          %s418 = sshll.u32 %s409, 4
          %s419 = int_to_ptr.vmem [resolvable:$true] %s418
          %s420 = sshll.u32 %s417, 4
          %s421 = int_to_ptr.hbm [resolvable:$true] %s420
          %426 = dma.vmem_to_hbm [thread:$0]  %s419, 4096, %s421, %s406, 128, 128, 8
        $region44: #{tpu_custom_call.1} parent=31 // pred_fallthru
          _
      $region32: #{tpu_custom_call.1} parent=5 // pred_fallthru
        _
      %p427 = scmp.le.s32.totalorder 2, %s16
      // Predicated region
      $region45: #{tpu_custom_call.1} parent=5 // pred_check
        %p428 = pneg %p427
      $region46: #{tpu_custom_call.1} parent=5 // pred_check_branch
        %430 = sbr.rel (%p428) target = $region48
      $region47: #{tpu_custom_call.1} parent=5 // pred_region
        %s431 = ssub.s32 %s16, 2
        // Predicated region
        $region49: #{tpu_custom_call.1} parent=47 // pred_check
          %p432 = pneg %p113
        $region50: #{tpu_custom_call.1} parent=47 // pred_check_branch
          %434 = sbr.rel (%p432) target = $region52
        $region51: #{tpu_custom_call.1} parent=47 // pred_region
          %s435 = sand.u32 %s98, 1
          %s436 = scalar_lea.sflag [#allocation4], %s435
          %s437 = sand.u32 %s98, 1
          %s438 = smul.addr %s437, 256
          %s439 = scalar_lea.vmem [#allocation7], %s438
          %441 = dma.done %s436, 4096
        $region52: #{tpu_custom_call.1} parent=47 // pred_fallthru
          _
      $region48: #{tpu_custom_call.1} parent=5 // pred_fallthru
        _
    $region6: #{tpu_custom_call.1} parent=1 // loop_footer
      %s20 = sadd.s32 1, %s16
    $region7: #{tpu_custom_call.1} parent=1 // loop_footer_branch
      %15 = sbr.rel target = $region3
    $region8: #{tpu_custom_call.1} parent=1 // loop_exit
      _
    %442 = vsyncpa [#allocation3], 1
    %s443 = scalar_lea.sflag [#allocation3], 1
    %444 = vsyncpa %s443, 1
    %445 = vsyncpa [#allocation6], 1
    %446 = vsyncpa [#allocation4], 1
    %s447 = scalar_lea.sflag [#allocation4], 1
    %448 = vsyncpa %s447, 1

</llo_original>
